<compile_context>
chip_gen: v6e
topology: v6e:2x2x1
jax: 0.10.0
libtpu: 0.0.40
codegen_flags: <defaults>
</compile_context>

<pallas_src>
import jax
import jax.numpy as jnp
from jax.experimental import pallas as pl
from jax.experimental.pallas import tpu as pltpu


_CLAMP_MIN = -10.0
_TARGET_BLOCK_BYTES = 2 * 1024 * 1024  # ~2 MiB per block (mem-bound sweet spot)


def _hardlog_kernel(x_ref, o_ref):
    x = x_ref[...]
    # clamp(log(x), min=-10) == max(log(x), -10)
    # log -> EUP slot, max -> VPU slot; kernel is firmly HBM-bandwidth bound.
    o_ref[...] = jnp.maximum(jnp.log(x), jnp.asarray(_CLAMP_MIN, x.dtype))


def _hardlog_ref(x):
    return jnp.maximum(jnp.log(x), jnp.asarray(_CLAMP_MIN, x.dtype))


def hard_log(x: jax.Array) -> jax.Array:
    """Elementwise clamp(log(x), min=-10), computed in a Pallas TPU kernel."""
    orig_shape = x.shape
    total = x.size
    if total == 0:
        return x

    x_flat = x.reshape(-1)

    # Pick the widest lane count (multiple of 128) that divides into the data
    # cleanly; anything left over (< 128 elems per lane choice) is the "tail".
    lanes = next((l for l in (512, 256, 128) if total % l == 0), 128)
    bulk = (total // lanes) * lanes
    tail = total - bulk

    pieces = []

    if bulk > 0:
        rows = bulk // lanes
        itemsize = jnp.dtype(x.dtype).itemsize
        # ~2 MiB blocks, rows rounded down to a sublane multiple of 8.
        row_tile = max(8, (_TARGET_BLOCK_BYTES // (lanes * itemsize)) // 8 * 8)
        # If the whole bulk is smaller than one tile, use the full extent
        # (block == full array dims is always a legal block shape).
        row_block = min(row_tile, rows)

        x2d = x_flat[:bulk].reshape(rows, lanes)  # contiguous reshape: no copy
        grid = (pl.cdiv(rows, row_block),)

        out2d = pl.pallas_call(
            _hardlog_kernel,
            out_shape=jax.ShapeDtypeStruct((rows, lanes), x.dtype),
            grid=grid,
            in_specs=[pl.BlockSpec((row_block, lanes), lambda i: (i, 0))],
            out_specs=pl.BlockSpec((row_block, lanes), lambda i: (i, 0)),
            compiler_params=pltpu.CompilerParams(
                dimension_semantics=("parallel",),
            ),
        )(x2d)
        pieces.append(out2d.reshape(-1))

    if tail > 0:
        # Tiny remainder (< 128 elems): plain jnp, fused by XLA.
        pieces.append(_hardlog_ref(x_flat[bulk:]))

    out_flat = pieces[0] if len(pieces) == 1 else jnp.concatenate(pieces)
    return out_flat.reshape(orig_shape)


if __name__ == "__main__":
    key = jax.random.PRNGKey(0)

    fn = jax.jit(hard_log)

    # Primary test: small NCHW input, values in [0, 4) so both the log branch
    # and the clamp-at--10 branch (log(0) -> -inf -> -10) are exercised.
    x = jax.random.uniform(key, (2, 4, 16, 16), dtype=jnp.float32,
                           minval=0.0, maxval=4.0)
    out = jax.block_until_ready(fn(x))
    ref = _hardlog_ref(x)
    assert out.shape == x.shape and out.dtype == x.dtype
    assert bool(jnp.allclose(out, ref, atol=1e-6, rtol=1e-6, equal_nan=True)), \
        "mismatch vs reference (primary)"

    # Secondary test: total not divisible by 256/512 (exercises lanes=128 path
    # with a full-extent block).
    key2 = jax.random.fold_in(key, 1)
    x2 = jax.random.uniform(key2, (2, 4, 16, 17), dtype=jnp.float32,
                            minval=0.0, maxval=4.0)
    out2 = jax.block_until_ready(jax.jit(hard_log)(x2))
    ref2 = _hardlog_ref(x2)
    assert bool(jnp.allclose(out2, ref2, atol=1e-6, rtol=1e-6, equal_nan=True)), \
        "mismatch vs reference (non-divisible)"

    # Tertiary test: tiny array smaller than one lane row (pure jnp tail path).
    key3 = jax.random.fold_in(key, 2)
    x3 = jax.random.uniform(key3, (3, 5, 7), dtype=jnp.float32,
                            minval=0.0, maxval=4.0)
    out3 = jax.block_until_ready(jax.jit(hard_log)(x3))
    ref3 = _hardlog_ref(x3)
    assert bool(jnp.allclose(out3, ref3, atol=1e-6, rtol=1e-6, equal_nan=True)), \
        "mismatch vs reference (tail-only)"

    print("KERNEL_OK")
</pallas_src>

<mosaic_0001>
module attributes {stable_mosaic.version = 11 : i64} {
  func.func @_hardlog_kernel(%arg0: i32, %arg1: memref<4x512xf32, #tpu.memory_space<vmem>>, %arg2: memref<4x512xf32, #tpu.memory_space<vmem>>) attributes {dimension_semantics = [#tpu.dimension_semantics<parallel>], iteration_bounds = array<i64: 1>, scalar_prefetch = 0 : i64, scratch_operands = 0 : i64, tpu.core_type = #tpu.core_type<tc>, window_params = [{transform_indices = @transform_0, window_bounds = array<i64: 4, 512>}, {transform_indices = @transform_1, window_bounds = array<i64: 4, 512>}]} {
    %c0 = arith.constant 0 : index
    %c0_0 = arith.constant 0 : index
    %0 = vector.load %arg1[%c0, %c0_0] : memref<4x512xf32, #tpu.memory_space<vmem>>, vector<4x512xf32>
    %1 = math.log %0 : vector<4x512xf32>
    %cst = arith.constant -1.000000e+01 : f32
    %2 = vector.broadcast %cst : f32 to vector<4x512xf32>
    %3 = arith.maximumf %1, %2 : vector<4x512xf32>
    %c0_1 = arith.constant 0 : index
    %c0_2 = arith.constant 0 : index
    %4 = vector.load %arg2[%c0_1, %c0_2] : memref<4x512xf32, #tpu.memory_space<vmem>>, vector<4x512xf32>
    tpu.vector_store %arg2[%c0_1, %c0_2], %3 {strides = array<i32>} : memref<4x512xf32, #tpu.memory_space<vmem>>, vector<4x512xf32>,
    return
  }
  func.func @transform_0(%arg0: i32) -> (i32, i32) {
    %c0_i32 = arith.constant 0 : i32
    %c0_i32_0 = arith.constant 0 : i32
    return %arg0, %c0_i32 : i32, i32
  }
  func.func @transform_1(%arg0: i32) -> (i32, i32) {
    %c0_i32 = arith.constant 0 : i32
    %c0_i32_0 = arith.constant 0 : i32
    return %arg0, %c0_i32 : i32, i32
  }
}

</mosaic_0001>

<llo_original>
// kernel: hard_log.1
$region0: #{hard_log.1}
  #allocation0 [shape = 'u32[]', space=smem, size = 0x4, offset = 0x4, fixed_abs, tag = 'smem constant byte address 0x4 - core index']
  #allocation1 [shape = 'u32[144,128]{1,0:T(1,128)}', space=vmem, size = 0x12000, scoped, tag = 'internal scratch']
  %s0 = inlined_call_operand.vmem [shape: f32[4,512], index: 0, kind: input, shape index: {}]
  %s1 = inlined_call_operand.vmem [shape: f32[4,512], index: 1, kind: output, shape index: {}]
  %s2 = sld [smem:[#allocation0]]
  $region14: #{hard_log.1} parent=0
    _
  %s4 = ssub.s32 1, %s2
  %s5 = scalar_select 0, %s4, %s2
  // Predicated region
  $region2: #{hard_log.1} parent=0 // pred_check
    _
  $region3: #{hard_log.1} parent=0 // pred_check_branch
    %7 = sbr.rel (0) target = $region5
  $region4: #{hard_log.1} parent=0 // pred_region
    _
  $region5: #{hard_log.1} parent=0 // pred_fallthru
    _
  %v8 = vld [vmem:[%s0] sm:$0xff]
  %v9 = vld [vmem:[%s0 + $0x8] sm:$0xff]
  %v10 = vlog2.pop %v8
  %v11 = vmul.f32 %v10, 0.6931472
  %v12 = vlog2.pop %v9
  %v13 = vmul.f32 %v12, 0.6931472
  %v14 = vmax.f32 %v11, -10.0
  %v15 = vmax.f32 %v13, -10.0
  %16 = vst [vmem:[%s1] sm:$0xff] %v14
  %17 = vst [vmem:[%s1 + $0x8] sm:$0xff] %v15
  // Predicated region
  $region6: #{hard_log.1} parent=0 // pred_check
    _
  $region7: #{hard_log.1} parent=0 // pred_check_branch
    %19 = sbr.rel (0) target = $region9
  $region8: #{hard_log.1} parent=0 // pred_region
    _
  $region9: #{hard_log.1} parent=0 // pred_fallthru
    _
  // Predicated region
  $region10: #{hard_log.1} parent=0 // pred_check
    _
  $region11: #{hard_log.1} parent=0 // pred_check_branch
    %21 = sbr.rel (0) target = $region13
  $region12: #{hard_log.1} parent=0 // pred_region
    _
  $region13: #{hard_log.1} parent=0 // pred_fallthru
    _

</llo_original>
